<compile_context>
chip_gen: v6e
topology: v6e:2x2x1
jax: 0.10.0
libtpu: 0.0.40
codegen_flags: <defaults>
</compile_context>

<pallas_src>
import math
import numpy as np
import jax
import jax.numpy as jnp
from jax import lax
from jax.experimental import pallas as pl
from jax.experimental.pallas import tpu as pltpu

_LANE = 128
_SUB = 8


# ----------------------- resample() math (host-side, tiny matrices) -----------------
def _lanczos(x, a):
    cond = np.logical_and(-a < x, x < a)
    out = np.where(cond, np.sinc(x) * np.sinc(x / a), 0.0)   # np.sinc handles x == 0
    return out / out.sum()


def _ramp(ratio, width):
    n = math.ceil(width / ratio + 1)
    out = np.arange(n, dtype=np.float64) * ratio
    return np.concatenate([-out[1:][::-1], out])[1:-1]


def _reflect(j, h):
    if j < 0:
        return -j
    if j >= h:
        return 2 * (h - 1) - j
    return j


def _antialias_matrix(h, dh):
    """Matrix form of: reflect-pad + conv with lanczos(ramp(dh/h, 2), 2)."""
    k = _lanczos(_ramp(dh / h, 2), 2)
    kh = k.shape[0]
    pad = (kh - 1) // 2
    m = np.zeros((h, h), np.float64)
    for i in range(h):
        for t in range(kh):
            m[i, _reflect(i + t - pad, h)] += k[t]
    return m


def _cubic(s, a=-0.75):
    s = abs(s)
    if s <= 1.0:
        return (a + 2.0) * s ** 3 - (a + 3.0) * s ** 2 + 1.0
    if s < 2.0:
        return a * s ** 3 - 5.0 * a * s ** 2 + 8.0 * a * s - 4.0 * a
    return 0.0


def _bicubic_matrix(out_size, in_size):
    """Matrix form of F.interpolate(mode='bicubic', align_corners=True), 1-D."""
    m = np.zeros((out_size, in_size), np.float64)
    for i in range(out_size):
        src = 0.0 if out_size == 1 else i * (in_size - 1) / (out_size - 1)
        x0 = math.floor(src)
        t = src - x0
        for j in range(-1, 3):
            idx = min(max(x0 + j, 0), in_size - 1)
            m[i, idx] += _cubic(t - j)
    return m


def _resample_matrix(cut_size, size):
    """Combined (cut_size x size) matrix: anti-alias (if downsizing) + bicubic."""
    aa = _antialias_matrix(size, cut_size) if cut_size < size else np.eye(size)
    return (_bicubic_matrix(cut_size, size) @ aa).astype(np.float32)


def _round_up(v, m):
    return ((v + m - 1) // m) * m


# ------------------------------- Pallas kernel ---------------------------------------
def _cutouts_kernel(img_ref, mh_ref, mwt_ref, o_ref):
    # img_ref: (nc*Hp, Wp)     VMEM, resident across the grid (constant index_map, 1 buf)
    # mh_ref:  (CB, Q, Hp)     H-axis resample matrices (crop row offset baked in)
    # mwt_ref: (CB, Wp, Q)     W-axis resample matrices, pre-transposed (col offset baked)
    # o_ref:   (CB, nc, Q, Q)  output block at final shape (no lane padding / no slice)
    cb, nc, q, _ = o_ref.shape
    hp = mh_ref.shape[2]
    cdt = mh_ref.dtype

    def per_cutout(j, carry):
        mh = mh_ref[j]                                                 # (Q, Hp)
        mwt = mwt_ref[j]                                               # (Wp, Q)
        for c in range(nc):                                            # nc small, static
            img_c = img_ref[pl.ds(c * hp, hp), :]                      # (Hp, Wp)
            # H-axis reduction first (fewer MXU FLOPs than W-first), f32 accumulate.
            t = jnp.dot(mh, img_c, preferred_element_type=jnp.float32)   # (Q, Wp)
            res = jnp.dot(t.astype(cdt), mwt,
                          preferred_element_type=jnp.float32)            # (Q, Q)
            o_ref[j, c] = res.astype(o_ref.dtype)
        return carry

    # Rolled loop bounds the live range of the f32 intermediates (one cutout at a time).
    lax.fori_loop(0, cb, per_cutout, 0)


# --------------------------------- wrapper --------------------------------------------
def make_cutouts(x, cut_size, cutn, cut_pow=1.0, noise_fac=0.1, key=None, seed=0,
                 cuts_per_block=8, compute_dtype=jnp.bfloat16, out_dtype=None,
                 debug=False):
    """Pallas-TPU forward of MakeCutouts (batch N must be 1).

    Returns (cutn, C, cut_size, cut_size). With debug=True also returns a pure-JAX
    reference mirroring the kernel dataflow (only meaningful when noise_fac == 0).
    """
    n, ch, side_y, side_x = x.shape
    assert n == 1, "MakeCutouts noise broadcast implies batch size 1"
    nc = n * ch
    q = cut_size
    out_dtype = x.dtype if out_dtype is None else out_dtype
    max_size = min(side_x, side_y)
    min_size = min(side_x, side_y, cut_size)

    hp = _round_up(side_y, _SUB)      # sublane-aligned per-channel stride in the slab
    wp = _round_up(side_x, _LANE)     # lane-dense slab width / K of the W-pass matmul

    # --- host-side crop geometry + folded resample matrices -------------------------
    # TODO(synk): crop sizes are data-dependent Python ints, so the lanczos/bicubic
    # weight matrices are built on host each call (cached per size); only these tiny
    # (Q x Hp)/(Wp x Q) matrices are uploaded, never image copies.
    rng = np.random.default_rng(seed)
    mh_np = np.zeros((cutn, q, hp), np.float32)
    mwt_np = np.zeros((cutn, wp, q), np.float32)
    r_cache = {}
    for k in range(cutn):
        size = int(float(rng.random()) ** cut_pow * (max_size - min_size) + min_size)
        offx = int(rng.integers(0, side_x - size + 1))
        offy = int(rng.integers(0, side_y - size + 1))
        r = r_cache.get(size)
        if r is None:
            r = _resample_matrix(q, size)
            r_cache[size] = r
        mh_np[k, :, offy:offy + size] = r              # crop row-offset baked in
        mwt_np[k, offx:offx + size, :] = r.T           # crop col-offset baked in (pre-T)
    mh = jnp.asarray(mh_np).astype(compute_dtype)
    mwt = jnp.asarray(mwt_np).astype(compute_dtype)

    # --- single padded image slab, uploaded once, VMEM-resident ---------------------
    img = jnp.pad(jnp.asarray(x, jnp.float32).reshape(nc, side_y, side_x),
                  ((0, 0), (0, hp - side_y), (0, wp - side_x)))
    img2 = img.reshape(nc * hp, wp).astype(compute_dtype)

    # --- cutouts per grid step; keep grid length even (>=2) for v7x's 2 TensorCores --
    divs = [d for d in range(1, cutn + 1) if cutn % d == 0 and d <= max(1, cuts_per_block)]
    even = [d for d in divs if (cutn // d) % 2 == 0]
    cb = max(even) if even else max(divs)
    grid_len = cutn // cb

    # --- VMEM budget from actual shapes, capped by the attached chip's capacity ------
    bc = jnp.dtype(compute_dtype).itemsize
    bo = jnp.dtype(out_dtype).itemsize
    need = (nc * hp * wp * bc                                   # image, single buffer
            + 2 * cb * ((q * hp + wp * q) * bc                  # Mh+MwT, double-buffered
                        + nc * q * q * bo)                      # output block
            + nc * (q * wp + q * q) * 4                         # f32 intermediates
            + (8 << 20))                                        # headroom
    try:
        cap = pltpu.get_tpu_info().vmem_capacity_bytes
    except Exception:
        cap = 64 << 20                                          # no TPU attached: safe cap
    vmem_limit = int(min(max(need, 32 << 20), int(cap * 0.75)))

    out = pl.pallas_call(
        _cutouts_kernel,
        out_shape=jax.ShapeDtypeStruct((cutn, nc, q, q), out_dtype),
        grid=(grid_len,),
        in_specs=[
            pl.BlockSpec((nc * hp, wp), lambda b: (0, 0),
                         pipeline_mode=pl.Buffered(1)),          # resident, single buffer
            pl.BlockSpec((cb, q, hp), lambda b: (b, 0, 0)),      # Mh block
            pl.BlockSpec((cb, wp, q), lambda b: (b, 0, 0)),      # MwT block
        ],
        out_specs=pl.BlockSpec((cb, nc, q, q), lambda b: (b, 0, 0, 0)),
        compiler_params=pltpu.CompilerParams(
            dimension_semantics=("parallel",),                   # shards steps on v7x TCs
            vmem_limit_bytes=vmem_limit),
    )(img2, mh, mwt)

    batch = out.reshape(cutn * n, ch, q, q)                      # metadata-only reshape

    # TODO(synk): Kornia random augmentations (RandomHorizontalFlip/Sharpness/Affine/
    # Perspective/ColorJitter) have no clean Pallas equivalent; treated as identity.
    # Gaussian noise is applied as a plain XLA op (pltpu.prng_* is Mosaic-TPU-only and
    # breaks interpret mode); it compiles away entirely when noise_fac == 0.
    if noise_fac:
        key = jax.random.PRNGKey(0) if key is None else key
        k_fac, k_noise = jax.random.split(key)
        facs = jax.random.uniform(k_fac, (cutn * n, 1, 1, 1), jnp.float32, 0.0, noise_fac)
        noise = jax.random.normal(k_noise, batch.shape, jnp.float32)
        batch = (batch.astype(jnp.float32) + facs * noise).astype(out_dtype)

    if not debug:
        return batch

    # Debug-only pure-JAX reference mirroring the kernel dataflow (noise-free path).
    imgs = img2.reshape(nc, hp, wp)
    t = jnp.einsum('kqh,chw->kcqw', mh, imgs, preferred_element_type=jnp.float32,
                   precision=lax.Precision.HIGHEST).astype(compute_dtype)
    ref = jnp.einsum('kcqw,kwp->kcqp', t, mwt, preferred_element_type=jnp.float32,
                     precision=lax.Precision.HIGHEST)
    ref = ref.astype(out_dtype).reshape(cutn * n, ch, q, q)
    return batch, ref


if __name__ == "__main__":
    cut_size = 8   # stands in for perceptor.visual.input_resolution, kept small
    cutn = 8       # stands in for args.cutn (=64), kept small
    key = jax.random.PRNGKey(0)
    kx, kcall = jax.random.split(key)
    x = jax.random.uniform(kx, (1, 3, 20, 16), jnp.float32)     # NCHW input image

    # 1) math check: f32 compute, no noise, vs the mirrored pure-JAX reference.
    clean, ref = make_cutouts(x, cut_size, cutn, cut_pow=1.0, noise_fac=0.0, key=kcall,
                              compute_dtype=jnp.float32, debug=True)
    clean = jax.block_until_ready(clean)
    assert clean.shape == (cutn, 3, cut_size, cut_size)
    assert np.allclose(np.asarray(clean, np.float32), np.asarray(ref, np.float32),
                       rtol=2e-2, atol=2e-2)

    # 2) fast path: bf16 compute + bf16 output + gaussian noise (applied post-kernel).
    noisy = make_cutouts(x, cut_size, cutn, cut_pow=1.0, noise_fac=0.1, key=kcall,
                         compute_dtype=jnp.bfloat16, out_dtype=jnp.bfloat16)
    noisy = jax.block_until_ready(noisy)
    assert noisy.shape == (cutn, 3, cut_size, cut_size)
    noisy_np = np.asarray(noisy, np.float32)
    assert np.all(np.isfinite(noisy_np))
    assert np.max(np.abs(noisy_np - np.asarray(clean, np.float32))) < 1.0

    print("KERNEL_OK")
</pallas_src>

<mosaic_0001>
module attributes {stable_mosaic.version = 11 : i64} {
  func.func @_cutouts_kernel(%arg0: i32, %arg1: memref<72x128xf32, #tpu.memory_space<vmem>>, %arg2: memref<4x8x24xf32, #tpu.memory_space<vmem>>, %arg3: memref<4x128x8xf32, #tpu.memory_space<vmem>>, %arg4: memref<4x3x8x8xf32, #tpu.memory_space<vmem>>) attributes {dimension_semantics = [#tpu.dimension_semantics<parallel>], iteration_bounds = array<i64: 2>, scalar_prefetch = 0 : i64, scratch_operands = 0 : i64, tpu.core_type = #tpu.core_type<tc>, window_params = [{pipeline_mode = #tpu.pipeline_mode<synchronous>, transform_indices = @transform_0, window_bounds = array<i64: 72, 128>}, {transform_indices = @transform_1, window_bounds = array<i64: 4, 8, 24>}, {transform_indices = @transform_2, window_bounds = array<i64: 4, 128, 8>}, {transform_indices = @transform_3, window_bounds = array<i64: 4, 3, 8, 8>}]} {
    %c0_i32 = arith.constant 0 : i32
    %c4_i32 = arith.constant 4 : i32
    %0 = arith.addi %c0_i32, %c4_i32 : i32
    %c1_i32 = arith.constant 1 : i32
    scf.for %arg5 = %c0_i32 to %0 step %c1_i32  : i32 {
      %1 = arith.index_cast %arg5 : i32 to index
      %c0 = arith.constant 0 : index
      %c0_1 = arith.constant 0 : index
      %2 = vector.load %arg2[%1, %c0, %c0_1] : memref<4x8x24xf32, #tpu.memory_space<vmem>>, vector<1x8x24xf32>
      %3 = vector.shape_cast %2 : vector<1x8x24xf32> to vector<8x24xf32>
      %4 = arith.index_cast %arg5 : i32 to index
      %c0_2 = arith.constant 0 : index
      %c0_3 = arith.constant 0 : index
      %5 = vector.load %arg3[%4, %c0_2, %c0_3] : memref<4x128x8xf32, #tpu.memory_space<vmem>>, vector<1x128x8xf32>
      %6 = vector.shape_cast %5 : vector<1x128x8xf32> to vector<128x8xf32>
      %c0_4 = arith.constant 0 : index
      %c0_5 = arith.constant 0 : index
      %7 = vector.load %arg1[%c0_4, %c0_5] : memref<72x128xf32, #tpu.memory_space<vmem>>, vector<24x128xf32>
      %cst = arith.constant dense<0.000000e+00> : vector<8x128xf32>
      %8 = tpu.matmul %3, %7, %cst {dimension_numbers = #tpu.dot_dimension_numbers<[1], [0], [0], [1], [0, 0, 1, 1], [], []>} : vector<8x24xf32>, vector<24x128xf32>, vector<8x128xf32> -> vector<8x128xf32>
      %cst_6 = arith.constant dense<0.000000e+00> : vector<8x8xf32>
      %9 = tpu.matmul %8, %6, %cst_6 {dimension_numbers = #tpu.dot_dimension_numbers<[1], [0], [0], [1], [0, 0, 1, 1], [], []>} : vector<8x128xf32>, vector<128x8xf32>, vector<8x8xf32> -> vector<8x8xf32>
      %10 = arith.index_cast %arg5 : i32 to index
      %c0_7 = arith.constant 0 : index
      %c0_8 = arith.constant 0 : index
      %c0_9 = arith.constant 0 : index
      %11 = vector.load %arg4[%10, %c0_7, %c0_8, %c0_9] : memref<4x3x8x8xf32, #tpu.memory_space<vmem>>, vector<1x1x8x8xf32>
      %12 = vector.shape_cast %11 : vector<1x1x8x8xf32> to vector<8x8xf32>
      %13 = vector.shape_cast %9 : vector<8x8xf32> to vector<1x1x8x8xf32>
      tpu.vector_store %arg4[%10, %c0_7, %c0_8, %c0_9], %13 {strides = array<i32>} : memref<4x3x8x8xf32, #tpu.memory_space<vmem>>, vector<1x1x8x8xf32>,
      %c24 = arith.constant 24 : index
      %c0_10 = arith.constant 0 : index
      %14 = vector.load %arg1[%c24, %c0_10] : memref<72x128xf32, #tpu.memory_space<vmem>>, vector<24x128xf32>
      %cst_11 = arith.constant dense<0.000000e+00> : vector<8x128xf32>
      %15 = tpu.matmul %3, %14, %cst_11 {dimension_numbers = #tpu.dot_dimension_numbers<[1], [0], [0], [1], [0, 0, 1, 1], [], []>} : vector<8x24xf32>, vector<24x128xf32>, vector<8x128xf32> -> vector<8x128xf32>
      %cst_12 = arith.constant dense<0.000000e+00> : vector<8x8xf32>
      %16 = tpu.matmul %15, %6, %cst_12 {dimension_numbers = #tpu.dot_dimension_numbers<[1], [0], [0], [1], [0, 0, 1, 1], [], []>} : vector<8x128xf32>, vector<128x8xf32>, vector<8x8xf32> -> vector<8x8xf32>
      %17 = arith.index_cast %arg5 : i32 to index
      %c1 = arith.constant 1 : index
      %c0_13 = arith.constant 0 : index
      %c0_14 = arith.constant 0 : index
      %18 = vector.load %arg4[%17, %c1, %c0_13, %c0_14] : memref<4x3x8x8xf32, #tpu.memory_space<vmem>>, vector<1x1x8x8xf32>
      %19 = vector.shape_cast %18 : vector<1x1x8x8xf32> to vector<8x8xf32>
      %20 = vector.shape_cast %16 : vector<8x8xf32> to vector<1x1x8x8xf32>
      tpu.vector_store %arg4[%17, %c1, %c0_13, %c0_14], %20 {strides = array<i32>} : memref<4x3x8x8xf32, #tpu.memory_space<vmem>>, vector<1x1x8x8xf32>,
      %c48 = arith.constant 48 : index
      %c0_15 = arith.constant 0 : index
      %21 = vector.load %arg1[%c48, %c0_15] : memref<72x128xf32, #tpu.memory_space<vmem>>, vector<24x128xf32>
      %cst_16 = arith.constant dense<0.000000e+00> : vector<8x128xf32>
      %22 = tpu.matmul %3, %21, %cst_16 {dimension_numbers = #tpu.dot_dimension_numbers<[1], [0], [0], [1], [0, 0, 1, 1], [], []>} : vector<8x24xf32>, vector<24x128xf32>, vector<8x128xf32> -> vector<8x128xf32>
      %cst_17 = arith.constant dense<0.000000e+00> : vector<8x8xf32>
      %23 = tpu.matmul %22, %6, %cst_17 {dimension_numbers = #tpu.dot_dimension_numbers<[1], [0], [0], [1], [0, 0, 1, 1], [], []>} : vector<8x128xf32>, vector<128x8xf32>, vector<8x8xf32> -> vector<8x8xf32>
      %24 = arith.index_cast %arg5 : i32 to index
      %c2 = arith.constant 2 : index
      %c0_18 = arith.constant 0 : index
      %c0_19 = arith.constant 0 : index
      %25 = vector.load %arg4[%24, %c2, %c0_18, %c0_19] : memref<4x3x8x8xf32, #tpu.memory_space<vmem>>, vector<1x1x8x8xf32>
      %26 = vector.shape_cast %25 : vector<1x1x8x8xf32> to vector<8x8xf32>
      %27 = vector.shape_cast %23 : vector<8x8xf32> to vector<1x1x8x8xf32>
      tpu.vector_store %arg4[%24, %c2, %c0_18, %c0_19], %27 {strides = array<i32>} : memref<4x3x8x8xf32, #tpu.memory_space<vmem>>, vector<1x1x8x8xf32>,
    }
    %c4_i32_0 = arith.constant 4 : i32
    return
  }
  func.func @transform_0(%arg0: i32) -> (i32, i32) {
    %c0_i32 = arith.constant 0 : i32
    %c0_i32_0 = arith.constant 0 : i32
    %c0_i32_1 = arith.constant 0 : i32
    return %c0_i32, %c0_i32_0 : i32, i32
  }
  func.func @transform_1(%arg0: i32) -> (i32, i32, i32) {
    %c0_i32 = arith.constant 0 : i32
    %c0_i32_0 = arith.constant 0 : i32
    %c0_i32_1 = arith.constant 0 : i32
    return %arg0, %c0_i32, %c0_i32_0 : i32, i32, i32
  }
  func.func @transform_2(%arg0: i32) -> (i32, i32, i32) {
    %c0_i32 = arith.constant 0 : i32
    %c0_i32_0 = arith.constant 0 : i32
    %c0_i32_1 = arith.constant 0 : i32
    return %arg0, %c0_i32, %c0_i32_0 : i32, i32, i32
  }
  func.func @transform_3(%arg0: i32) -> (i32, i32, i32, i32) {
    %c0_i32 = arith.constant 0 : i32
    %c0_i32_0 = arith.constant 0 : i32
    %c0_i32_1 = arith.constant 0 : i32
    %c0_i32_2 = arith.constant 0 : i32
    return %arg0, %c0_i32, %c0_i32_0, %c0_i32_1 : i32, i32, i32, i32
  }
}

</mosaic_0001>

<llo_original>
// kernel: tpu_custom_call.1
$region0: #{tpu_custom_call.1}
  #allocation0 [shape = 'u32[]', space=smem, size = 0x4, offset = 0x4, fixed_abs, tag = 'smem constant byte address 0x4 - core index']
  #allocation1 [shape = 'u32[144,128]{1,0:T(1,128)}', space=vmem, size = 0x12000, scoped, tag = 'internal scratch']
  %s0 = inlined_call_operand.vmem [shape: f32[72,128], index: 0, kind: input, shape index: {}]
  %s1 = inlined_call_operand.vmem [shape: f32[8,8,24], index: 1, kind: input, shape index: {}]
  %s2 = inlined_call_operand.vmem [shape: f32[8,128,8], index: 2, kind: input, shape index: {}]
  %s3 = inlined_call_operand.hbm [shape: f32[8,3,8,8], index: 3, kind: output, shape index: {}]
  %s4 = sld [smem:[#allocation0]]
  $region52: #{tpu_custom_call.1} parent=0
    _
  %s6 = ssub.s32 1, %s4
  %s7 = scalar_select 0, %s6, %s4
  $region1: #{tpu_custom_call.1} parent=0
    #allocation2 [shape = 'u8[98304]{0}', space=vmem, size = 0x18000, scoped, tag = 'output window, operand 0']
    #allocation3 [shape = 's32[2]{0}', space=sflag, size = 0x8, scoped, tag = 'scoped memory for tpu_custom_call.1']
    %8 = vsyncpa [#allocation3], 0
    %s9 = scalar_lea.sflag [#allocation3], 1
    %10 = vsyncpa %s9, 0
    loop: start=0, step=1, limit=4
    $region2: #{tpu_custom_call.1} parent=1 // loop_pre_header
      _
    $region3: #{tpu_custom_call.1} parent=1 // loop_header
      %s12 = sphi 0, %s16
      %p13 = scmp.ge.s32.totalorder %s12, 4
      %s20 = sphi 0, %s20
      %s22 = sphi 0, %s20
      %s23 = sphi 0, %s22
      %s37 = sphi 0, %s23
      %s43 = sphi 0, %s45
      %s46 = sphi 0, %s43
      %s47 = sphi 0, %s46
      %s63 = sphi 0, %s47
      %s69 = sphi 0, %s71
      %s72 = sphi 0, %s69
      %s73 = sphi 0, %s72
      %s89 = sphi 0, %s73
      %s95 = sphi 0, %s97
      %s98 = sphi 0, %s95
      %s99 = sphi 0, %s98
      %s115 = sphi 0, %s99
    $region4: #{tpu_custom_call.1} parent=1 // loop_header_branch
      %15 = sbr.rel (%p13) target = $region8
    $region5: #{tpu_custom_call.1} parent=1 // loop_body
      %s17 = ssub.s32 %s12, 1
      %s18 = ssub.s32 %s12, 2
      %s19 = sadd.s32 %s12, 1
      %s21 = sadd.s32 %s20, 1
      %p24 = scmp.eq.s32.totalorder %s12, 1
      %p25 = scmp.ne.s32.totalorder %s20, %s22
      %p26 = scmp.eq.s32.totalorder %s12, 0
      %p27 = por %p25, %p26
      %p28 = scmp.ne.s32.totalorder %s20, %s22
      %p29 = scmp.eq.s32.totalorder %s17, 1
      %p30 = por %p28, %p29
      %p31 = scmp.ne.s32.totalorder %s22, %s23
      %p32 = scmp.eq.s32.totalorder %s17, 0
      %p33 = por %p31, %p32
      %p34 = scmp.ne.s32.totalorder %s22, %s23
      %p35 = scmp.eq.s32.totalorder %s18, 1
      %p36 = por %p34, %p35
      %p38 = scmp.ne.s32.totalorder %s23, %s37
      %p39 = scmp.eq.s32.totalorder %s18, 0
      %p40 = por %p38, %p39
      %s41 = ssub.s32 %s12, %s19
      %p42 = scmp.eq.s32.totalorder %s41, 0
      %s44 = sadd.s32 %s43, 1
      %s45 = scalar_select %p42, %s43, %s44
      %p48 = pneg %p42
      %p49 = scmp.eq.s32.totalorder %s12, 1
      %p50 = por %p48, %p49
      %p51 = scmp.ne.s32.totalorder %s43, %s46
      %p52 = scmp.eq.s32.totalorder %s12, 0
      %p53 = por %p51, %p52
      %p54 = scmp.ne.s32.totalorder %s43, %s46
      %p55 = scmp.eq.s32.totalorder %s17, 1
      %p56 = por %p54, %p55
      %p57 = scmp.ne.s32.totalorder %s46, %s47
      %p58 = scmp.eq.s32.totalorder %s17, 0
      %p59 = por %p57, %p58
      %p60 = scmp.ne.s32.totalorder %s46, %s47
      %p61 = scmp.eq.s32.totalorder %s18, 1
      %p62 = por %p60, %p61
      %p64 = scmp.ne.s32.totalorder %s47, %s63
      %p65 = scmp.eq.s32.totalorder %s18, 0
      %p66 = por %p64, %p65
      %s67 = ssub.s32 %s12, %s19
      %p68 = scmp.eq.s32.totalorder %s67, 0
      %s70 = sadd.s32 %s69, 1
      %s71 = scalar_select %p68, %s69, %s70
      %p74 = pneg %p68
      %p75 = scmp.eq.s32.totalorder %s12, 1
      %p76 = por %p74, %p75
      %p77 = scmp.ne.s32.totalorder %s69, %s72
      %p78 = scmp.eq.s32.totalorder %s12, 0
      %p79 = por %p77, %p78
      %p80 = scmp.ne.s32.totalorder %s69, %s72
      %p81 = scmp.eq.s32.totalorder %s17, 1
      %p82 = por %p80, %p81
      %p83 = scmp.ne.s32.totalorder %s72, %s73
      %p84 = scmp.eq.s32.totalorder %s17, 0
      %p85 = por %p83, %p84
      %p86 = scmp.ne.s32.totalorder %s72, %s73
      %p87 = scmp.eq.s32.totalorder %s18, 1
      %p88 = por %p86, %p87
      %p90 = scmp.ne.s32.totalorder %s73, %s89
      %p91 = scmp.eq.s32.totalorder %s18, 0
      %p92 = por %p90, %p91
      %s93 = ssub.s32 %s12, %s19
      %p94 = scmp.eq.s32.totalorder %s93, 0
      %s96 = sadd.s32 %s95, 1
      %s97 = scalar_select %p94, %s95, %s96
      %p100 = pneg %p94
      %p101 = scmp.eq.s32.totalorder %s12, 1
      %p102 = por %p100, %p101
      %p103 = scmp.ne.s32.totalorder %s95, %s98
      %p104 = scmp.eq.s32.totalorder %s12, 0
      %p105 = por %p103, %p104
      %p106 = scmp.ne.s32.totalorder %s95, %s98
      %p107 = scmp.eq.s32.totalorder %s17, 1
      %p108 = por %p106, %p107
      %p109 = scmp.ne.s32.totalorder %s98, %s99
      %p110 = scmp.eq.s32.totalorder %s17, 0
      %p111 = por %p109, %p110
      %p112 = scmp.ne.s32.totalorder %s98, %s99
      %p113 = scmp.eq.s32.totalorder %s18, 1
      %p114 = por %p112, %p113
      %p116 = scmp.ne.s32.totalorder %s99, %s115
      %p117 = scmp.eq.s32.totalorder %s18, 0
      %p118 = por %p116, %p117
      %p119 = scmp.le.s32.totalorder 1, %s12
      %p120 = scmp.lt.s32.totalorder %s12, 3
      %p121 = pnand %p119, %p120
      %p122 = pneg %p121
      // Predicated region
      $region9: #{tpu_custom_call.1} parent=5 // pred_check
        _
      $region10: #{tpu_custom_call.1} parent=5 // pred_check_branch
        %124 = sbr.rel (%p121) target = $region12
      $region11: #{tpu_custom_call.1} parent=5 // pred_region
        %s125 = ssub.s32 %s12, 1
        // Predicated region
        $region13: #{tpu_custom_call.1} parent=11 // pred_check
          %p126 = pneg %p33
        $region14: #{tpu_custom_call.1} parent=11 // pred_check_branch
          %128 = sbr.rel (%p126) target = $region16
        $region15: #{tpu_custom_call.1} parent=11 // pred_region
          _
        $region16: #{tpu_custom_call.1} parent=11 // pred_fallthru
          _
      $region12: #{tpu_custom_call.1} parent=5 // pred_fallthru
        _
      %p129 = scmp.lt.s32.totalorder %s12, 2
      // Predicated region
      $region17: #{tpu_custom_call.1} parent=5 // pred_check
        %p130 = pneg %p129
      $region18: #{tpu_custom_call.1} parent=5 // pred_check_branch
        %132 = sbr.rel (%p130) target = $region20
      $region19: #{tpu_custom_call.1} parent=5 // pred_region
        // Predicated region
        $region21: #{tpu_custom_call.1} parent=19 // pred_check
          %p133 = pneg %p53
        $region22: #{tpu_custom_call.1} parent=19 // pred_check_branch
          %135 = sbr.rel (%p133) target = $region24
        $region23: #{tpu_custom_call.1} parent=19 // pred_region
          %s136 = smul.u32 4, %s12
          %p137 = scmp.lt.s32.totalorder %s136, 7
          %s138 = scalar_select %p137, %s136, 7
          %s139 = smul.addr %s138, 8
          %s140 = scalar_lea.vmem %s1, %s139
          %s141 = smul.u32 4, %s12
        $region24: #{tpu_custom_call.1} parent=19 // pred_fallthru
          _
        // Predicated region
        $region25: #{tpu_custom_call.1} parent=19 // pred_check
          %p142 = pneg %p79
        $region26: #{tpu_custom_call.1} parent=19 // pred_check_branch
          %144 = sbr.rel (%p142) target = $region28
        $region27: #{tpu_custom_call.1} parent=19 // pred_region
          %s145 = smul.u32 4, %s12
          %p146 = scmp.lt.s32.totalorder %s145, 7
          %s147 = scalar_select %p146, %s145, 7
          %s148 = smul.addr %s147, 16
          %s149 = smul.addr %s148, 8
          %s150 = scalar_lea.vmem %s2, %s149
          %s151 = smul.u32 4, %s12
        $region28: #{tpu_custom_call.1} parent=19 // pred_fallthru
          _
      $region20: #{tpu_custom_call.1} parent=5 // pred_fallthru
        _
      %p152 = scmp.le.s32.totalorder 1, %s12
      %p153 = scmp.lt.s32.totalorder %s12, 3
      %p154 = pnand %p152, %p153
      %p155 = pneg %p154
      // Predicated region
      $region29: #{tpu_custom_call.1} parent=5 // pred_check
        _
      $region30: #{tpu_custom_call.1} parent=5 // pred_check_branch
        %157 = sbr.rel (%p154) target = $region32
      $region31: #{tpu_custom_call.1} parent=5 // pred_region
        %s158 = ssub.s32 %s12, 1
        %p159 = pneg %p33
        %p160 = pneg %p30
        %s161 = smul.u32 4, %s17
        %p162 = scmp.lt.s32.totalorder %s161, 7
        %s163 = scalar_select %p162, %s161, 7
        %s164 = smul.addr %s163, 8
        %s165 = scalar_lea.vmem %s1, %s164
        %p166 = pneg %p59
        %p167 = pneg %p56
        %s168 = smul.u32 4, %s17
        %p169 = scmp.lt.s32.totalorder %s168, 7
        %s170 = scalar_select %p169, %s168, 7
        %s171 = smul.addr %s170, 16
        %s172 = smul.addr %s171, 8
        %s173 = scalar_lea.vmem %s2, %s172
        %p174 = pneg %p85
        %p175 = pneg %p82
        %p176 = pneg %p111
        %p177 = pneg %p108
        %s178 = sand.u32 %s98, 1
        %s179 = scalar_lea.sflag [#allocation3], %s178
        %s180 = sand.u32 %s98, 1
        %s181 = smul.addr %s180, 96
        %s182 = scalar_lea.vmem [#allocation2], %s181
        %s183 = smul.u32 4, %s17
        %p184 = scmp.lt.s32.totalorder %s183, 7
        %s185 = scalar_select %p184, %s183, 7
        %s186 = smul.addr %s185, 8
        %s187 = scalar_lea.vmem %s1, %s186
        %s188 = smul.u32 4, %s17
        %s189 = smul.u32 4, %s17
        %p190 = scmp.lt.s32.totalorder %s189, 7
        %s191 = scalar_select %p190, %s189, 7
        %s192 = smul.addr %s191, 16
        %s193 = smul.addr %s192, 8
        %s194 = scalar_lea.vmem %s2, %s193
        %s195 = smul.u32 4, %s17
        %s196 = smul.u32 4, %s17
        loop: start=0, step=1, limit=4
        $region33: #{tpu_custom_call.1} parent=31 // loop_pre_header
          _
        $region34: #{tpu_custom_call.1} parent=31 // loop_header
          %s198 = sphi 0, %s202
          %p199 = scmp.ge.s32.totalorder %s198, 4
        $region35: #{tpu_custom_call.1} parent=31 // loop_header_branch
          %201 = sbr.rel (%p199) target = $region39
        $region36: #{tpu_custom_call.1} parent=31 // loop_body
          %s203 = smul.u32 %s198, 8
          %s204 = scalar_lea.vmem %s187, %s203
          %v205 = vld [vmem:[%s204] sm:$0xff]
          %s206 = smul.u32 %s198, 128
          %s207 = scalar_lea.vmem %s194, %s206
          %v208 = vld [vmem:[%s207] sm:$0xff]
          %v209 = vld [vmem:[%s207 + $0x8] sm:$0xff]
          %v210 = vld [vmem:[%s207 + $0x10] sm:$0xff]
          %v211 = vld [vmem:[%s207 + $0x18] sm:$0xff]
          %v212 = vld [vmem:[%s207 + $0x20] sm:$0xff]
          %v213 = vld [vmem:[%s207 + $0x28] sm:$0xff]
          %v214 = vld [vmem:[%s207 + $0x30] sm:$0xff]
          %v215 = vld [vmem:[%s207 + $0x38] sm:$0xff]
          %v216 = vld [vmem:[%s207 + $0x40] sm:$0xff]
          %v217 = vld [vmem:[%s207 + $0x48] sm:$0xff]
          %v218 = vld [vmem:[%s207 + $0x50] sm:$0xff]
          %v219 = vld [vmem:[%s207 + $0x58] sm:$0xff]
          %v220 = vld [vmem:[%s207 + $0x60] sm:$0xff]
          %v221 = vld [vmem:[%s207 + $0x68] sm:$0xff]
          %v222 = vld [vmem:[%s207 + $0x70] sm:$0xff]
          %v223 = vld [vmem:[%s207 + $0x78] sm:$0xff]
          %v224 = vld [vmem:[%s0] sm:$0xff]
          %v225 = vld [vmem:[%s0 + $0x8] sm:$0xff]
          %v226 = vld [vmem:[%s0 + $0x10] sm:$0xff]
          %vm227 = vcmask 195584
          %v229 = vsel %vm227, %v205, 0
          %231 = vmatprep.subr.mxu0 0.0
          %232 = vmatpush1.msra.mxu0 0.0
          %233 = vmatprep.subr.mxu0 0.0
          %234 = vmatpush1.msra.mxu0 0.0
          %235 = vmatprep.subr.mxu0 0.0
          %236 = vmatpush1.msra.mxu0 0.0
          %237 = vmatprep.subr.mxu0 0.0
          %238 = vmatpush1.msra.mxu0 0.0
          %239 = vmatprep.subr.mxu0 0.0
          %240 = vmatpush1.msra.mxu0 0.0
          %241 = vmatprep.subr.mxu0 0.0
          %242 = vmatpush1.msra.mxu0 0.0
          %243 = vmatprep.subr.mxu0 0.0
          %244 = vmatpush1.msra.mxu0 0.0
          %245 = vmatprep.subr.mxu0 0.0
          %246 = vmatpush1.msra.mxu0 0.0
          %247 = vmatprep.subr.mxu0 0.0
          %248 = vmatpush1.msra.mxu0 0.0
          %249 = vmatprep.subr.mxu0 0.0
          %250 = vmatpush1.msra.mxu0 0.0
          %251 = vmatprep.subr.mxu0 0.0
          %252 = vmatpush1.msra.mxu0 0.0
          %253 = vmatprep.subr.mxu0 0.0
          %254 = vmatpush1.msra.mxu0 0.0
          %255 = vmatprep.subr.mxu0 0.0
          %256 = vmatpush1.msra.mxu0 0.0
          %257 = vmatprep.subr.mxu0 0.0
          %258 = vmatpush1.msra.mxu0 %v226
          %259 = vmatprep.subr.mxu0 0.0
          %260 = vmatpush1.msra.mxu0 %v225
          %261 = vmatprep.subr.mxu0 0.0
          %262 = vmatpush1.msra.mxu0 %v224
          %263 = vmatprep.subr.mxu0 0.0
          %264 = vmatpush2.msra.mxu0 0.0
          %265 = vmatprep.subr.mxu0 0.0
          %266 = vmatpush2.msra.mxu0 0.0
          %267 = vmatprep.subr.mxu0 0.0
          %268 = vmatpush2.msra.mxu0 0.0
          %269 = vmatprep.subr.mxu0 0.0
          %270 = vmatpush2.msra.mxu0 0.0
          %271 = vmatprep.subr.mxu0 0.0
          %272 = vmatpush2.msra.mxu0 0.0
          %273 = vmatprep.subr.mxu0 0.0
          %274 = vmatpush2.msra.mxu0 0.0
          %275 = vmatprep.subr.mxu0 0.0
          %276 = vmatpush2.msra.mxu0 0.0
          %277 = vmatprep.subr.mxu0 0.0
          %278 = vmatpush2.msra.mxu0 0.0
          %279 = vmatprep.subr.mxu0 0.0
          %280 = vmatpush2.msra.mxu0 0.0
          %281 = vmatprep.subr.mxu0 0.0
          %282 = vmatpush2.msra.mxu0 0.0
          %283 = vmatprep.subr.mxu0 0.0
          %284 = vmatpush2.msra.mxu0 0.0
          %285 = vmatprep.subr.mxu0 0.0
          %286 = vmatpush2.msra.mxu0 0.0
          %287 = vmatprep.subr.mxu0 0.0
          %288 = vmatpush2.msra.mxu0 0.0
          %289 = vmatprep.subr.mxu0 0.0
          %290 = vmatpush2.msra.mxu0 0.0
          %291 = vmatprep.subr.mxu0 0.0
          %292 = vmatpush2.msra.mxu0 0.0
          %293 = vmatprep.subr.mxu0 0.0
          %294 = vmatpush2.msra.mxu0 0.0
          %295 = vmatprep.mubr.f32.mxu0 0.0
          %296 = vmatmul.mubr.f32.gmra.mxu0 %v229
          %v297 = vpop.f32.mrf.mxu0
          %v298 = vadd.f32 0.0, %v297
          %v299 = vpop.f32.mrf.mxu0
          %300 = vdwg.mxu0
          %301 = vmatprep.subr.mxu0 0.0
          %302 = vmatpush1.msra.mxu0 %v223
          %303 = vmatprep.subr.mxu0 0.0
          %304 = vmatpush1.msra.mxu0 %v222
          %305 = vmatprep.subr.mxu0 0.0
          %306 = vmatpush1.msra.mxu0 %v221
          %307 = vmatprep.subr.mxu0 0.0
          %308 = vmatpush1.msra.mxu0 %v220
          %309 = vmatprep.subr.mxu0 0.0
          %310 = vmatpush1.msra.mxu0 %v219
          %311 = vmatprep.subr.mxu0 0.0
          %312 = vmatpush1.msra.mxu0 %v218
          %313 = vmatprep.subr.mxu0 0.0
          %314 = vmatpush1.msra.mxu0 %v217
          %315 = vmatprep.subr.mxu0 0.0
          %316 = vmatpush1.msra.mxu0 %v216
          %317 = vmatprep.subr.mxu0 0.0
          %318 = vmatpush1.msra.mxu0 %v215
          %319 = vmatprep.subr.mxu0 0.0
          %320 = vmatpush1.msra.mxu0 %v214
          %321 = vmatprep.subr.mxu0 0.0
          %322 = vmatpush1.msra.mxu0 %v213
          %323 = vmatprep.subr.mxu0 0.0
          %324 = vmatpush1.msra.mxu0 %v212
          %325 = vmatprep.subr.mxu0 0.0
          %326 = vmatpush1.msra.mxu0 %v211
          %327 = vmatprep.subr.mxu0 0.0
          %328 = vmatpush1.msra.mxu0 %v210
          %329 = vmatprep.subr.mxu0 0.0
          %330 = vmatpush1.msra.mxu0 %v209
          %331 = vmatprep.subr.mxu0 0.0
          %332 = vmatpush1.msra.mxu0 %v208
          %333 = vmatprep.subr.mxu0 0.0
          %334 = vmatpush2.msra.mxu0 0.0
          %335 = vmatprep.subr.mxu0 0.0
          %336 = vmatpush2.msra.mxu0 0.0
          %337 = vmatprep.subr.mxu0 0.0
          %338 = vmatpush2.msra.mxu0 0.0
          %339 = vmatprep.subr.mxu0 0.0
          %340 = vmatpush2.msra.mxu0 0.0
          %341 = vmatprep.subr.mxu0 0.0
          %342 = vmatpush2.msra.mxu0 0.0
          %343 = vmatprep.subr.mxu0 0.0
          %344 = vmatpush2.msra.mxu0 0.0
          %345 = vmatprep.subr.mxu0 0.0
          %346 = vmatpush2.msra.mxu0 0.0
          %347 = vmatprep.subr.mxu0 0.0
          %348 = vmatpush2.msra.mxu0 0.0
          %349 = vmatprep.subr.mxu0 0.0
          %350 = vmatpush2.msra.mxu0 0.0
          %351 = vmatprep.subr.mxu0 0.0
          %352 = vmatpush2.msra.mxu0 0.0
          %353 = vmatprep.subr.mxu0 0.0
          %354 = vmatpush2.msra.mxu0 0.0
          %355 = vmatprep.subr.mxu0 0.0
          %356 = vmatpush2.msra.mxu0 0.0
          %357 = vmatprep.subr.mxu0 0.0
          %358 = vmatpush2.msra.mxu0 0.0
          %359 = vmatprep.subr.mxu0 0.0
          %360 = vmatpush2.msra.mxu0 0.0
          %361 = vmatprep.subr.mxu0 0.0
          %362 = vmatpush2.msra.mxu0 0.0
          %363 = vmatprep.subr.mxu0 0.0
          %364 = vmatpush2.msra.mxu0 0.0
          %365 = vmatprep.mubr.f32.mxu0 0.0
          %366 = vmatmul.mubr.f32.gmra.mxu0 %v298
          %v367 = vpop.f32.mrf.mxu0
          %v368 = vadd.f32 0.0, %v367
          %v369 = vpop.f32.mrf.mxu0
          %370 = vdwg.mxu0
          %s371 = smul.u32 %s198, 24
          %s372 = scalar_lea.vmem %s182, %s371 [#allocation2]
          %vm373 = vcmask 64512
          %374 = vst.msk [vmem:[%s372] sm:$0xff] %vm373, %v368
          %v375 = vld [vmem:[%s0 + $0x18] sm:$0xff]
          %v376 = vld [vmem:[%s0 + $0x20] sm:$0xff]
          %v377 = vld [vmem:[%s0 + $0x28] sm:$0xff]
          %378 = vmatprep.subr.mxu0 0.0
          %379 = vmatpush1.msra.mxu0 0.0
          %380 = vmatprep.subr.mxu0 0.0
          %381 = vmatpush1.msra.mxu0 0.0
          %382 = vmatprep.subr.mxu0 0.0
          %383 = vmatpush1.msra.mxu0 0.0
          %384 = vmatprep.subr.mxu0 0.0
          %385 = vmatpush1.msra.mxu0 0.0
          %386 = vmatprep.subr.mxu0 0.0
          %387 = vmatpush1.msra.mxu0 0.0
          %388 = vmatprep.subr.mxu0 0.0
          %389 = vmatpush1.msra.mxu0 0.0
          %390 = vmatprep.subr.mxu0 0.0
          %391 = vmatpush1.msra.mxu0 0.0
          %392 = vmatprep.subr.mxu0 0.0
          %393 = vmatpush1.msra.mxu0 0.0
          %394 = vmatprep.subr.mxu0 0.0
          %395 = vmatpush1.msra.mxu0 0.0
          %396 = vmatprep.subr.mxu0 0.0
          %397 = vmatpush1.msra.mxu0 0.0
          %398 = vmatprep.subr.mxu0 0.0
          %399 = vmatpush1.msra.mxu0 0.0
          %400 = vmatprep.subr.mxu0 0.0
          %401 = vmatpush1.msra.mxu0 0.0
          %402 = vmatprep.subr.mxu0 0.0
          %403 = vmatpush1.msra.mxu0 0.0
          %404 = vmatprep.subr.mxu0 0.0
          %405 = vmatpush1.msra.mxu0 %v377
          %406 = vmatprep.subr.mxu0 0.0
          %407 = vmatpush1.msra.mxu0 %v376
          %408 = vmatprep.subr.mxu0 0.0
          %409 = vmatpush1.msra.mxu0 %v375
          %410 = vmatprep.subr.mxu0 0.0
          %411 = vmatpush2.msra.mxu0 0.0
          %412 = vmatprep.subr.mxu0 0.0
          %413 = vmatpush2.msra.mxu0 0.0
          %414 = vmatprep.subr.mxu0 0.0
          %415 = vmatpush2.msra.mxu0 0.0
          %416 = vmatprep.subr.mxu0 0.0
          %417 = vmatpush2.msra.mxu0 0.0
          %418 = vmatprep.subr.mxu0 0.0
          %419 = vmatpush2.msra.mxu0 0.0
          %420 = vmatprep.subr.mxu0 0.0
          %421 = vmatpush2.msra.mxu0 0.0
          %422 = vmatprep.subr.mxu0 0.0
          %423 = vmatpush2.msra.mxu0 0.0
          %424 = vmatprep.subr.mxu0 0.0
          %425 = vmatpush2.msra.mxu0 0.0
          %426 = vmatprep.subr.mxu0 0.0
          %427 = vmatpush2.msra.mxu0 0.0
          %428 = vmatprep.subr.mxu0 0.0
          %429 = vmatpush2.msra.mxu0 0.0
          %430 = vmatprep.subr.mxu0 0.0
          %431 = vmatpush2.msra.mxu0 0.0
          %432 = vmatprep.subr.mxu0 0.0
          %433 = vmatpush2.msra.mxu0 0.0
          %434 = vmatprep.subr.mxu0 0.0
          %435 = vmatpush2.msra.mxu0 0.0
          %436 = vmatprep.subr.mxu0 0.0
          %437 = vmatpush2.msra.mxu0 0.0
          %438 = vmatprep.subr.mxu0 0.0
          %439 = vmatpush2.msra.mxu0 0.0
          %440 = vmatprep.subr.mxu0 0.0
          %441 = vmatpush2.msra.mxu0 0.0
          %442 = vmatprep.mubr.f32.mxu0 0.0
          %443 = vmatmul.mubr.f32.gmra.mxu0 %v229
          %v444 = vpop.f32.mrf.mxu0
          %v445 = vadd.f32 0.0, %v444
          %v446 = vpop.f32.mrf.mxu0
          %447 = vdwg.mxu0
          %448 = vmatprep.subr.mxu0 0.0
          %449 = vmatpush1.msra.mxu0 %v223
          %450 = vmatprep.subr.mxu0 0.0
          %451 = vmatpush1.msra.mxu0 %v222
          %452 = vmatprep.subr.mxu0 0.0
          %453 = vmatpush1.msra.mxu0 %v221
          %454 = vmatprep.subr.mxu0 0.0
          %455 = vmatpush1.msra.mxu0 %v220
          %456 = vmatprep.subr.mxu0 0.0
          %457 = vmatpush1.msra.mxu0 %v219
          %458 = vmatprep.subr.mxu0 0.0
          %459 = vmatpush1.msra.mxu0 %v218
          %460 = vmatprep.subr.mxu0 0.0
          %461 = vmatpush1.msra.mxu0 %v217
          %462 = vmatprep.subr.mxu0 0.0
          %463 = vmatpush1.msra.mxu0 %v216
          %464 = vmatprep.subr.mxu0 0.0
          %465 = vmatpush1.msra.mxu0 %v215
          %466 = vmatprep.subr.mxu0 0.0
          %467 = vmatpush1.msra.mxu0 %v214
          %468 = vmatprep.subr.mxu0 0.0
          %469 = vmatpush1.msra.mxu0 %v213
          %470 = vmatprep.subr.mxu0 0.0
          %471 = vmatpush1.msra.mxu0 %v212
          %472 = vmatprep.subr.mxu0 0.0
          %473 = vmatpush1.msra.mxu0 %v211
          %474 = vmatprep.subr.mxu0 0.0
          %475 = vmatpush1.msra.mxu0 %v210
          %476 = vmatprep.subr.mxu0 0.0
          %477 = vmatpush1.msra.mxu0 %v209
          %478 = vmatprep.subr.mxu0 0.0
          %479 = vmatpush1.msra.mxu0 %v208
          %480 = vmatprep.subr.mxu0 0.0
          %481 = vmatpush2.msra.mxu0 0.0
          %482 = vmatprep.subr.mxu0 0.0
          %483 = vmatpush2.msra.mxu0 0.0
          %484 = vmatprep.subr.mxu0 0.0
          %485 = vmatpush2.msra.mxu0 0.0
          %486 = vmatprep.subr.mxu0 0.0
          %487 = vmatpush2.msra.mxu0 0.0
          %488 = vmatprep.subr.mxu0 0.0
          %489 = vmatpush2.msra.mxu0 0.0
          %490 = vmatprep.subr.mxu0 0.0
          %491 = vmatpush2.msra.mxu0 0.0
          %492 = vmatprep.subr.mxu0 0.0
          %493 = vmatpush2.msra.mxu0 0.0
          %494 = vmatprep.subr.mxu0 0.0
          %495 = vmatpush2.msra.mxu0 0.0
          %496 = vmatprep.subr.mxu0 0.0
          %497 = vmatpush2.msra.mxu0 0.0
          %498 = vmatprep.subr.mxu0 0.0
          %499 = vmatpush2.msra.mxu0 0.0
          %500 = vmatprep.subr.mxu0 0.0
          %501 = vmatpush2.msra.mxu0 0.0
          %502 = vmatprep.subr.mxu0 0.0
          %503 = vmatpush2.msra.mxu0 0.0
          %504 = vmatprep.subr.mxu0 0.0
          %505 = vmatpush2.msra.mxu0 0.0
          %506 = vmatprep.subr.mxu0 0.0
          %507 = vmatpush2.msra.mxu0 0.0
          %508 = vmatprep.subr.mxu0 0.0
          %509 = vmatpush2.msra.mxu0 0.0
          %510 = vmatprep.subr.mxu0 0.0
          %511 = vmatpush2.msra.mxu0 0.0
          %512 = vmatprep.mubr.f32.mxu0 0.0
          %513 = vmatmul.mubr.f32.gmra.mxu0 %v445
          %v514 = vpop.f32.mrf.mxu0
          %v515 = vadd.f32 0.0, %v514
          %v516 = vpop.f32.mrf.mxu0
          %517 = vdwg.mxu0
          %s518 = sadd.s32 8, %s371
          %s519 = scalar_lea.vmem %s182, %s518 [#allocation2]
          %520 = vst.msk [vmem:[%s519] sm:$0xff] %vm373, %v515
          %v521 = vld [vmem:[%s0 + $0x30] sm:$0xff]
          %v522 = vld [vmem:[%s0 + $0x38] sm:$0xff]
          %v523 = vld [vmem:[%s0 + $0x40] sm:$0xff]
          %524 = vmatprep.subr.mxu0 0.0
          %525 = vmatpush1.msra.mxu0 0.0
          %526 = vmatprep.subr.mxu0 0.0
          %527 = vmatpush1.msra.mxu0 0.0
          %528 = vmatprep.subr.mxu0 0.0
          %529 = vmatpush1.msra.mxu0 0.0
          %530 = vmatprep.subr.mxu0 0.0
          %531 = vmatpush1.msra.mxu0 0.0
          %532 = vmatprep.subr.mxu0 0.0
          %533 = vmatpush1.msra.mxu0 0.0
          %534 = vmatprep.subr.mxu0 0.0
          %535 = vmatpush1.msra.mxu0 0.0
          %536 = vmatprep.subr.mxu0 0.0
          %537 = vmatpush1.msra.mxu0 0.0
          %538 = vmatprep.subr.mxu0 0.0
          %539 = vmatpush1.msra.mxu0 0.0
          %540 = vmatprep.subr.mxu0 0.0
          %541 = vmatpush1.msra.mxu0 0.0
          %542 = vmatprep.subr.mxu0 0.0
          %543 = vmatpush1.msra.mxu0 0.0
          %544 = vmatprep.subr.mxu0 0.0
          %545 = vmatpush1.msra.mxu0 0.0
          %546 = vmatprep.subr.mxu0 0.0
          %547 = vmatpush1.msra.mxu0 0.0
          %548 = vmatprep.subr.mxu0 0.0
          %549 = vmatpush1.msra.mxu0 0.0
          %550 = vmatprep.subr.mxu0 0.0
          %551 = vmatpush1.msra.mxu0 %v523
          %552 = vmatprep.subr.mxu0 0.0
          %553 = vmatpush1.msra.mxu0 %v522
          %554 = vmatprep.subr.mxu0 0.0
          %555 = vmatpush1.msra.mxu0 %v521
          %556 = vmatprep.subr.mxu0 0.0
          %557 = vmatpush2.msra.mxu0 0.0
          %558 = vmatprep.subr.mxu0 0.0
          %559 = vmatpush2.msra.mxu0 0.0
          %560 = vmatprep.subr.mxu0 0.0
          %561 = vmatpush2.msra.mxu0 0.0
          %562 = vmatprep.subr.mxu0 0.0
          %563 = vmatpush2.msra.mxu0 0.0
          %564 = vmatprep.subr.mxu0 0.0
          %565 = vmatpush2.msra.mxu0 0.0
          %566 = vmatprep.subr.mxu0 0.0
          %567 = vmatpush2.msra.mxu0 0.0
          %568 = vmatprep.subr.mxu0 0.0
          %569 = vmatpush2.msra.mxu0 0.0
          %570 = vmatprep.subr.mxu0 0.0
          %571 = vmatpush2.msra.mxu0 0.0
          %572 = vmatprep.subr.mxu0 0.0
          %573 = vmatpush2.msra.mxu0 0.0
          %574 = vmatprep.subr.mxu0 0.0
          %575 = vmatpush2.msra.mxu0 0.0
          %576 = vmatprep.subr.mxu0 0.0
          %577 = vmatpush2.msra.mxu0 0.0
          %578 = vmatprep.subr.mxu0 0.0
          %579 = vmatpush2.msra.mxu0 0.0
          %580 = vmatprep.subr.mxu0 0.0
          %581 = vmatpush2.msra.mxu0 0.0
          %582 = vmatprep.subr.mxu0 0.0
          %583 = vmatpush2.msra.mxu0 0.0
          %584 = vmatprep.subr.mxu0 0.0
          %585 = vmatpush2.msra.mxu0 0.0
          %586 = vmatprep.subr.mxu0 0.0
          %587 = vmatpush2.msra.mxu0 0.0
          %588 = vmatprep.mubr.f32.mxu0 0.0
          %589 = vmatmul.mubr.f32.gmra.mxu0 %v229
          %v590 = vpop.f32.mrf.mxu0
          %v591 = vadd.f32 0.0, %v590
          %v592 = vpop.f32.mrf.mxu0
          %593 = vdwg.mxu0
          %594 = vmatprep.subr.mxu0 0.0
          %595 = vmatpush1.msra.mxu0 %v223
          %596 = vmatprep.subr.mxu0 0.0
          %597 = vmatpush1.msra.mxu0 %v222
          %598 = vmatprep.subr.mxu0 0.0
          %599 = vmatpush1.msra.mxu0 %v221
          %600 = vmatprep.subr.mxu0 0.0
          %601 = vmatpush1.msra.mxu0 %v220
          %602 = vmatprep.subr.mxu0 0.0
          %603 = vmatpush1.msra.mxu0 %v219
          %604 = vmatprep.subr.mxu0 0.0
          %605 = vmatpush1.msra.mxu0 %v218
          %606 = vmatprep.subr.mxu0 0.0
          %607 = vmatpush1.msra.mxu0 %v217
          %608 = vmatprep.subr.mxu0 0.0
          %609 = vmatpush1.msra.mxu0 %v216
          %610 = vmatprep.subr.mxu0 0.0
          %611 = vmatpush1.msra.mxu0 %v215
          %612 = vmatprep.subr.mxu0 0.0
          %613 = vmatpush1.msra.mxu0 %v214
          %614 = vmatprep.subr.mxu0 0.0
          %615 = vmatpush1.msra.mxu0 %v213
          %616 = vmatprep.subr.mxu0 0.0
          %617 = vmatpush1.msra.mxu0 %v212
          %618 = vmatprep.subr.mxu0 0.0
          %619 = vmatpush1.msra.mxu0 %v211
          %620 = vmatprep.subr.mxu0 0.0
          %621 = vmatpush1.msra.mxu0 %v210
          %622 = vmatprep.subr.mxu0 0.0
          %623 = vmatpush1.msra.mxu0 %v209
          %624 = vmatprep.subr.mxu0 0.0
          %625 = vmatpush1.msra.mxu0 %v208
          %626 = vmatprep.subr.mxu0 0.0
          %627 = vmatpush2.msra.mxu0 0.0
          %628 = vmatprep.subr.mxu0 0.0
          %629 = vmatpush2.msra.mxu0 0.0
          %630 = vmatprep.subr.mxu0 0.0
          %631 = vmatpush2.msra.mxu0 0.0
          %632 = vmatprep.subr.mxu0 0.0
          %633 = vmatpush2.msra.mxu0 0.0
          %634 = vmatprep.subr.mxu0 0.0
          %635 = vmatpush2.msra.mxu0 0.0
          %636 = vmatprep.subr.mxu0 0.0
          %637 = vmatpush2.msra.mxu0 0.0
          %638 = vmatprep.subr.mxu0 0.0
          %639 = vmatpush2.msra.mxu0 0.0
          %640 = vmatprep.subr.mxu0 0.0
          %641 = vmatpush2.msra.mxu0 0.0
          %642 = vmatprep.subr.mxu0 0.0
          %643 = vmatpush2.msra.mxu0 0.0
          %644 = vmatprep.subr.mxu0 0.0
          %645 = vmatpush2.msra.mxu0 0.0
          %646 = vmatprep.subr.mxu0 0.0
          %647 = vmatpush2.msra.mxu0 0.0
          %648 = vmatprep.subr.mxu0 0.0
          %649 = vmatpush2.msra.mxu0 0.0
          %650 = vmatprep.subr.mxu0 0.0
          %651 = vmatpush2.msra.mxu0 0.0
          %652 = vmatprep.subr.mxu0 0.0
          %653 = vmatpush2.msra.mxu0 0.0
          %654 = vmatprep.subr.mxu0 0.0
          %655 = vmatpush2.msra.mxu0 0.0
          %656 = vmatprep.subr.mxu0 0.0
          %657 = vmatpush2.msra.mxu0 0.0
          %658 = vmatprep.mubr.f32.mxu0 0.0
          %659 = vmatmul.mubr.f32.gmra.mxu0 %v591
          %v660 = vpop.f32.mrf.mxu0
          %v661 = vadd.f32 0.0, %v660
          %v662 = vpop.f32.mrf.mxu0
          %663 = vdwg.mxu0
          %s664 = sadd.s32 16, %s371
          %s665 = scalar_lea.vmem %s182, %s664 [#allocation2]
          %666 = vst.msk [vmem:[%s665] sm:$0xff] %vm373, %v661
        $region37: #{tpu_custom_call.1} parent=31 // loop_footer
          %s202 = sadd.s32 1, %s198
        $region38: #{tpu_custom_call.1} parent=31 // loop_footer_branch
          %197 = sbr.rel target = $region34
        $region39: #{tpu_custom_call.1} parent=31 // loop_exit
          _
        %s667 = sand.u32 %s98, 1
        %s668 = scalar_lea.sflag [#allocation3], %s667
        %s669 = sand.u32 %s98, 1
        %s670 = smul.addr %s669, 96
        %s671 = scalar_lea.vmem [#allocation2], %s670
        // Predicated region
        $region40: #{tpu_custom_call.1} parent=31 // pred_check
          %p672 = pneg %p108
        $region41: #{tpu_custom_call.1} parent=31 // pred_check_branch
          %674 = sbr.rel (%p672) target = $region43
        $region42: #{tpu_custom_call.1} parent=31 // pred_region
          %s675 = smul.u32 4, %s17
          %s677 = ssub.s32 1536, 1536
          %678 = vsyncadd %s668, %s677
          %s679 = smul.addr %s675, 3
          %s680 = smul.addr %s679, 128
          %s681 = scalar_lea.hbm %s3, %s680
          %s682 = sshll.u32 %s671, 4
          %s683 = int_to_ptr.vmem [resolvable:$true] %s682
          %688 = dma.vmem_to_hbm [thread:$0]  %s683, 1536, %s681, %s668, 128, 128, 8
        $region43: #{tpu_custom_call.1} parent=31 // pred_fallthru
          _
      $region32: #{tpu_custom_call.1} parent=5 // pred_fallthru
        _
      %p689 = scmp.le.s32.totalorder 2, %s12
      // Predicated region
      $region44: #{tpu_custom_call.1} parent=5 // pred_check
        %p690 = pneg %p689
      $region45: #{tpu_custom_call.1} parent=5 // pred_check_branch
        %692 = sbr.rel (%p690) target = $region47
      $region46: #{tpu_custom_call.1} parent=5 // pred_region
        %s693 = ssub.s32 %s12, 2
        // Predicated region
        $region48: #{tpu_custom_call.1} parent=46 // pred_check
          %p694 = pneg %p114
        $region49: #{tpu_custom_call.1} parent=46 // pred_check_branch
          %696 = sbr.rel (%p694) target = $region51
        $region50: #{tpu_custom_call.1} parent=46 // pred_region
          %s697 = sand.u32 %s99, 1
          %s698 = scalar_lea.sflag [#allocation3], %s697
          %s699 = sand.u32 %s99, 1
          %s700 = smul.addr %s699, 96
          %s701 = scalar_lea.vmem [#allocation2], %s700
          %702 = dma.done %s698, 1536
        $region51: #{tpu_custom_call.1} parent=46 // pred_fallthru
          _
      $region47: #{tpu_custom_call.1} parent=5 // pred_fallthru
        _
    $region6: #{tpu_custom_call.1} parent=1 // loop_footer
      %s16 = sadd.s32 1, %s12
    $region7: #{tpu_custom_call.1} parent=1 // loop_footer_branch
      %11 = sbr.rel target = $region3
    $region8: #{tpu_custom_call.1} parent=1 // loop_exit
      _
    %703 = vsyncpa [#allocation3], 1
    %s704 = scalar_lea.sflag [#allocation3], 1
    %705 = vsyncpa %s704, 1

</llo_original>
